<compile_context>
chip_gen: v7x
topology: tpu7x:2x2x1
jax: 0.10.0
libtpu: 0.0.40
codegen_flags: <defaults>
</compile_context>

<pallas_src>
import jax
import jax.numpy as jnp
from jax.experimental import pallas as pl
from jax.experimental.pallas import tpu as pltpu


def _scale_kernel(x_ref, s_ref, o_ref):
    # x_ref: (TR, HW), s_ref: (TR, 1) (broadcast along lanes), o_ref: (TR, HW)
    o_ref[...] = x_ref[...] * s_ref[...]


def _sublane_multiple(dtype):
    # f32 -> 8, bf16 -> 16, int8/fp8 -> 32 (packed dtypes pack along sublanes).
    itemsize = jnp.dtype(dtype).itemsize
    return 8 * max(1, 4 // itemsize)


def _choose_row_tile(rows, hw, dtype):
    """Pick the row-tile size (multiple of the dtype's sublane packing)."""
    sub = _sublane_multiple(dtype)
    lanes = pl.cdiv(hw, 128) * 128
    bytes_per_row = lanes * jnp.dtype(dtype).itemsize
    # Cap the x/out block at ~3 MiB: 2 arrays x 2 buffers x 3 MiB = 12 MiB,
    # safely under v5e's 16 MiB default scoped VMEM (32 MiB on v6e/v7x).
    max_block_bytes = 3 * 1024 * 1024
    tr = max(sub, (max_block_bytes // bytes_per_row) // sub * sub)
    # Prefer exactly 2 grid steps when there is enough work: one per v7x
    # TensorCore, and input-prefetch/output-writeback overlap on 1-TC chips.
    if rows >= 2 * sub:
        half = pl.cdiv(pl.cdiv(rows, 2), sub) * sub
        tr = min(tr, half)
    tr = min(tr, pl.cdiv(rows, sub) * sub)
    return int(tr)


def channel_scale(x, s, *, alias_input=False):
    """x: (N, C, H, W), s: (N, C, 1, 1) -> x * s (NCHW)."""
    N, C, H, W = x.shape
    assert s.shape == (N, C, 1, 1)
    rows, hw = N * C, H * W
    itemsize = jnp.dtype(x.dtype).itemsize

    x2 = x.reshape(rows, hw)
    s2 = s.reshape(rows, 1).astype(x.dtype)

    tr = _choose_row_tile(rows, hw, x.dtype)
    grid = (pl.cdiv(rows, tr),)

    # Only alias when the caller guarantees x is dead after this op; otherwise
    # XLA inserts a defensive copy that doubles HBM traffic.
    aliases = {0: 0} if alias_input else {}

    out = pl.pallas_call(
        _scale_kernel,
        out_shape=jax.ShapeDtypeStruct((rows, hw), x.dtype),
        grid_spec=pltpu.PrefetchScalarGridSpec(
            num_scalar_prefetch=0,
            grid=grid,
            in_specs=[
                pl.BlockSpec((tr, hw), lambda i: (i, 0)),
                # Per-step sliver of the scale column (Pallas masks partial
                # edge blocks; ~tr*itemsize bytes per step, fully hidden).
                pl.BlockSpec((tr, 1), lambda i: (i, 0)),
            ],
            out_specs=pl.BlockSpec((tr, hw), lambda i: (i, 0)),
        ),
        compiler_params=pltpu.CompilerParams(
            dimension_semantics=("parallel",)),
        cost_estimate=pl.CostEstimate(
            flops=rows * hw,
            bytes_accessed=2 * rows * hw * itemsize + rows * itemsize,
            transcendentals=0),
        input_output_aliases=aliases,
    )(x2, s2)

    return out.reshape(N, C, H, W)


if __name__ == "__main__":
    key = jax.random.PRNGKey(0)
    k1, k2 = jax.random.split(key)

    # Module's forward shapes.
    N, C, H, W = 1, 1056, 14, 14
    x343 = jax.random.normal(k1, (N, C, H, W), dtype=jnp.float32)
    x348 = jax.random.normal(k2, (N, C, 1, 1), dtype=jnp.float32)

    y = channel_scale(x343, x348)
    jax.block_until_ready(y)

    ref = x343 * x348
    assert y.shape == ref.shape
    assert jnp.allclose(y, ref, atol=1e-6, rtol=1e-6)
    print("KERNEL_OK")
</pallas_src>

<mosaic_0001>
module attributes {stable_mosaic.version = 11 : i64} {
  func.func @_scale_kernel(%arg0: i32, %arg1: memref<528x196xf32, #tpu.memory_space<vmem>>, %arg2: memref<528x1xf32, #tpu.memory_space<vmem>>, %arg3: memref<528x196xf32, #tpu.memory_space<vmem>>) attributes {dimension_semantics = [#tpu.dimension_semantics<parallel>], iteration_bounds = array<i64: 2>, scalar_prefetch = 0 : i64, scratch_operands = 0 : i64, tpu.core_type = #tpu.core_type<tc>, window_params = [{transform_indices = @transform_0, window_bounds = array<i64: 528, 196>}, {transform_indices = @transform_1, window_bounds = array<i64: 528, 1>}, {transform_indices = @transform_2, window_bounds = array<i64: 528, 196>}]} {
    %c0 = arith.constant 0 : index
    %c0_0 = arith.constant 0 : index
    %0 = vector.load %arg1[%c0, %c0_0] : memref<528x196xf32, #tpu.memory_space<vmem>>, vector<528x196xf32>
    %c0_1 = arith.constant 0 : index
    %c0_2 = arith.constant 0 : index
    %1 = vector.load %arg2[%c0_1, %c0_2] : memref<528x1xf32, #tpu.memory_space<vmem>>, vector<528x1xf32>
    %2 = vector.broadcast %1 : vector<528x1xf32> to vector<528x196xf32>
    %3 = arith.mulf %0, %2 : vector<528x196xf32>
    %c0_3 = arith.constant 0 : index
    %c0_4 = arith.constant 0 : index
    %4 = vector.load %arg3[%c0_3, %c0_4] : memref<528x196xf32, #tpu.memory_space<vmem>>, vector<528x196xf32>
    tpu.vector_store %arg3[%c0_3, %c0_4], %3 {strides = array<i32>} : memref<528x196xf32, #tpu.memory_space<vmem>>, vector<528x196xf32>,
    return
  }
  func.func @transform_0(%arg0: i32) -> (i32, i32) {
    %c0_i32 = arith.constant 0 : i32
    %c0_i32_0 = arith.constant 0 : i32
    return %arg0, %c0_i32 : i32, i32
  }
  func.func @transform_1(%arg0: i32) -> (i32, i32) {
    %c0_i32 = arith.constant 0 : i32
    %c0_i32_0 = arith.constant 0 : i32
    return %arg0, %c0_i32 : i32, i32
  }
  func.func @transform_2(%arg0: i32) -> (i32, i32) {
    %c0_i32 = arith.constant 0 : i32
    %c0_i32_0 = arith.constant 0 : i32
    return %arg0, %c0_i32 : i32, i32
  }
}

</mosaic_0001>

<llo_original>
// kernel: tpu_custom_call.1
$region0: #{tpu_custom_call.1}
  #allocation0 [shape = 'u32[]', space=smem, size = 0x4, offset = 0x4, fixed_abs, tag = 'smem constant byte address 0x4 - core index']
  #allocation1 [shape = 'u32[144,128]{1,0:T(1,128)}', space=vmem, size = 0x12000, scoped, tag = 'internal scratch']
  %s0 = inlined_call_operand.vmem [shape: f32[1056,196], index: 0, kind: input, shape index: {}]
  %s1 = inlined_call_operand.vmem [shape: f32[1056,1], index: 1, kind: input, shape index: {}]
  %s2 = inlined_call_operand.vmem [shape: f32[1056,196], index: 2, kind: output, shape index: {}]
  %s3 = sld [smem:[#allocation0]]
  $region41: #{tpu_custom_call.1} parent=0
    _
  %s5 = ssub.s32 1, %s3
  %s6 = scalar_select 0, %s5, %s3
  loop: start=0, step=1, limit=4
  $region2: #{tpu_custom_call.1} parent=0 // loop_pre_header
    _
  $region3: #{tpu_custom_call.1} parent=0 // loop_header
    %s8 = sphi 0, %s12
    %p9 = scmp.ge.s32.totalorder %s8, 4
    %s18 = sphi 0, %s20
    %s21 = sphi 0, %s18
    %s22 = sphi 0, %s21
    %s38 = sphi 0, %s22
    %s44 = sphi 0, %s46
    %s47 = sphi 0, %s44
    %s48 = sphi 0, %s47
    %s64 = sphi 0, %s48
    %s70 = sphi 0, %s72
    %s73 = sphi 0, %s70
    %s74 = sphi 0, %s73
    %s90 = sphi 0, %s74
  $region4: #{tpu_custom_call.1} parent=0 // loop_header_branch
    %11 = sbr.rel (%p9) target = $region8
  $region5: #{tpu_custom_call.1} parent=0 // loop_body
    %s13 = ssub.s32 %s8, 1
    %s14 = ssub.s32 %s8, 2
    %s15 = sadd.s32 %s8, 1
    %s16 = ssub.s32 %s8, %s15
    %p17 = scmp.eq.s32.totalorder %s16, 0
    %s19 = sadd.s32 %s18, 1
    %s20 = scalar_select %p17, %s18, %s19
    %p23 = pneg %p17
    %p24 = scmp.eq.s32.totalorder %s8, 1
    %p25 = por %p23, %p24
    %p26 = scmp.ne.s32.totalorder %s18, %s21
    %p27 = scmp.eq.s32.totalorder %s8, 0
    %p28 = por %p26, %p27
    %p29 = scmp.ne.s32.totalorder %s18, %s21
    %p30 = scmp.eq.s32.totalorder %s13, 1
    %p31 = por %p29, %p30
    %p32 = scmp.ne.s32.totalorder %s21, %s22
    %p33 = scmp.eq.s32.totalorder %s13, 0
    %p34 = por %p32, %p33
    %p35 = scmp.ne.s32.totalorder %s21, %s22
    %p36 = scmp.eq.s32.totalorder %s14, 1
    %p37 = por %p35, %p36
    %p39 = scmp.ne.s32.totalorder %s22, %s38
    %p40 = scmp.eq.s32.totalorder %s14, 0
    %p41 = por %p39, %p40
    %s42 = ssub.s32 %s8, %s15
    %p43 = scmp.eq.s32.totalorder %s42, 0
    %s45 = sadd.s32 %s44, 1
    %s46 = scalar_select %p43, %s44, %s45
    %p49 = pneg %p43
    %p50 = scmp.eq.s32.totalorder %s8, 1
    %p51 = por %p49, %p50
    %p52 = scmp.ne.s32.totalorder %s44, %s47
    %p53 = scmp.eq.s32.totalorder %s8, 0
    %p54 = por %p52, %p53
    %p55 = scmp.ne.s32.totalorder %s44, %s47
    %p56 = scmp.eq.s32.totalorder %s13, 1
    %p57 = por %p55, %p56
    %p58 = scmp.ne.s32.totalorder %s47, %s48
    %p59 = scmp.eq.s32.totalorder %s13, 0
    %p60 = por %p58, %p59
    %p61 = scmp.ne.s32.totalorder %s47, %s48
    %p62 = scmp.eq.s32.totalorder %s14, 1
    %p63 = por %p61, %p62
    %p65 = scmp.ne.s32.totalorder %s48, %s64
    %p66 = scmp.eq.s32.totalorder %s14, 0
    %p67 = por %p65, %p66
    %s68 = ssub.s32 %s8, %s15
    %p69 = scmp.eq.s32.totalorder %s68, 0
    %s71 = sadd.s32 %s70, 1
    %s72 = scalar_select %p69, %s70, %s71
    %p75 = pneg %p69
    %p76 = scmp.eq.s32.totalorder %s8, 1
    %p77 = por %p75, %p76
    %p78 = scmp.ne.s32.totalorder %s70, %s73
    %p79 = scmp.eq.s32.totalorder %s8, 0
    %p80 = por %p78, %p79
    %p81 = scmp.ne.s32.totalorder %s70, %s73
    %p82 = scmp.eq.s32.totalorder %s13, 1
    %p83 = por %p81, %p82
    %p84 = scmp.ne.s32.totalorder %s73, %s74
    %p85 = scmp.eq.s32.totalorder %s13, 0
    %p86 = por %p84, %p85
    %p87 = scmp.ne.s32.totalorder %s73, %s74
    %p88 = scmp.eq.s32.totalorder %s14, 1
    %p89 = por %p87, %p88
    %p91 = scmp.ne.s32.totalorder %s74, %s90
    %p92 = scmp.eq.s32.totalorder %s14, 0
    %p93 = por %p91, %p92
    %p94 = scmp.le.s32.totalorder 1, %s8
    %p95 = scmp.lt.s32.totalorder %s8, 3
    %p96 = pnand %p94, %p95
    %p97 = pneg %p96
    // Predicated region
    $region9: #{tpu_custom_call.1} parent=5 // pred_check
      _
    $region10: #{tpu_custom_call.1} parent=5 // pred_check_branch
      %99 = sbr.rel (%p96) target = $region12
    $region11: #{tpu_custom_call.1} parent=5 // pred_region
      %s100 = ssub.s32 %s8, 1
    $region12: #{tpu_custom_call.1} parent=5 // pred_fallthru
      _
    %p101 = scmp.lt.s32.totalorder %s8, 2
    // Predicated region
    $region13: #{tpu_custom_call.1} parent=5 // pred_check
      %p102 = pneg %p101
    $region14: #{tpu_custom_call.1} parent=5 // pred_check_branch
      %104 = sbr.rel (%p102) target = $region16
    $region15: #{tpu_custom_call.1} parent=5 // pred_region
      // Predicated region
      $region17: #{tpu_custom_call.1} parent=15 // pred_check
        %p105 = pneg %p28
      $region18: #{tpu_custom_call.1} parent=15 // pred_check_branch
        %107 = sbr.rel (%p105) target = $region20
      $region19: #{tpu_custom_call.1} parent=15 // pred_region
        %s108 = smul.u32 66, %s8
        %p109 = scmp.lt.s32.totalorder %s108, 131
        %s110 = scalar_select %p109, %s108, 131
        %s111 = smul.addr %s110, 2
        %s112 = smul.addr %s111, 8
        %s113 = scalar_lea.vmem %s0, %s112
        %s114 = smul.u32 66, %s8
      $region20: #{tpu_custom_call.1} parent=15 // pred_fallthru
        _
      // Predicated region
      $region21: #{tpu_custom_call.1} parent=15 // pred_check
        %p115 = pneg %p54
      $region22: #{tpu_custom_call.1} parent=15 // pred_check_branch
        %117 = sbr.rel (%p115) target = $region24
      $region23: #{tpu_custom_call.1} parent=15 // pred_region
        %s118 = smul.u32 66, %s8
        %p119 = scmp.lt.s32.totalorder %s118, 131
        %s120 = scalar_select %p119, %s118, 131
        %s121 = smul.addr %s120, 8
        %s122 = scalar_lea.vmem %s1, %s121
        %s123 = smul.u32 66, %s8
      $region24: #{tpu_custom_call.1} parent=15 // pred_fallthru
        _
    $region16: #{tpu_custom_call.1} parent=5 // pred_fallthru
      _
    %p124 = scmp.le.s32.totalorder 1, %s8
    %p125 = scmp.lt.s32.totalorder %s8, 3
    %p126 = pnand %p124, %p125
    %p127 = pneg %p126
    // Predicated region
    $region25: #{tpu_custom_call.1} parent=5 // pred_check
      _
    $region26: #{tpu_custom_call.1} parent=5 // pred_check_branch
      %129 = sbr.rel (%p126) target = $region28
    $region27: #{tpu_custom_call.1} parent=5 // pred_region
      %s130 = ssub.s32 %s8, 1
      %s131 = smul.u32 66, %s13
      %p132 = scmp.lt.s32.totalorder %s131, 131
      %s133 = scalar_select %p132, %s131, 131
      %s134 = smul.addr %s133, 2
      %s135 = smul.addr %s134, 8
      %s136 = scalar_lea.vmem %s0, %s135
      %p137 = pneg %p34
      %p138 = pneg %p31
      %s139 = smul.u32 66, %s13
      %p140 = scmp.lt.s32.totalorder %s139, 131
      %s141 = scalar_select %p140, %s139, 131
      %s142 = smul.addr %s141, 8
      %s143 = scalar_lea.vmem %s1, %s142
      %p144 = pneg %p60
      %p145 = pneg %p57
      %p146 = pneg %p86
      %p147 = pneg %p83
      %s148 = smul.u32 66, %s13
      %p149 = scmp.lt.s32.totalorder %s148, 131
      %s150 = scalar_select %p149, %s148, 131
      %s151 = smul.addr %s150, 2
      %s152 = smul.addr %s151, 8
      %s153 = scalar_lea.vmem %s2, %s152
      %s154 = smul.u32 66, %s13
      %p155 = scmp.lt.s32.totalorder %s154, 131
      %s156 = scalar_select %p155, %s154, 131
      %s157 = smul.addr %s156, 2
      %s158 = smul.addr %s157, 8
      %s159 = scalar_lea.vmem %s0, %s158
      %s160 = smul.u32 66, %s13
      %s161 = smul.u32 66, %s13
      %p162 = scmp.lt.s32.totalorder %s161, 131
      %s163 = scalar_select %p162, %s161, 131
      %s164 = smul.addr %s163, 8
      %s165 = scalar_lea.vmem %s1, %s164
      %s166 = smul.u32 66, %s13
      %s167 = smul.u32 66, %s13
      %p168 = scmp.lt.s32.totalorder %s167, 131
      %s169 = scalar_select %p168, %s167, 131
      %s170 = smul.addr %s169, 2
      %s171 = smul.addr %s170, 8
      %s172 = scalar_lea.vmem %s2, %s171
      %s173 = smul.u32 66, %s13
      %v174 = vld [vmem:[%s159] sm:$0xff]
      %v175 = vld [vmem:[%s159 + $0x8] sm:$0xff]
      %v176 = vld [vmem:[%s159 + $0x10] sm:$0xff]
      %v177 = vld [vmem:[%s159 + $0x18] sm:$0xff]
      %v178 = vld [vmem:[%s159 + $0x20] sm:$0xff]
      %v179 = vld [vmem:[%s159 + $0x28] sm:$0xff]
      %v180 = vld [vmem:[%s159 + $0x30] sm:$0xff]
      %v181 = vld [vmem:[%s159 + $0x38] sm:$0xff]
      %v182 = vld [vmem:[%s159 + $0x40] sm:$0xff]
      %v183 = vld [vmem:[%s159 + $0x48] sm:$0xff]
      %v184 = vld [vmem:[%s159 + $0x50] sm:$0xff]
      %v185 = vld [vmem:[%s159 + $0x58] sm:$0xff]
      %v186 = vld [vmem:[%s159 + $0x60] sm:$0xff]
      %v187 = vld [vmem:[%s159 + $0x68] sm:$0xff]
      %v188 = vld [vmem:[%s159 + $0x70] sm:$0xff]
      %v189 = vld [vmem:[%s159 + $0x78] sm:$0xff]
      %v190 = vld [vmem:[%s159 + $0x80] sm:$0xff]
      %v191 = vld [vmem:[%s159 + $0x88] sm:$0xff]
      %v192 = vld [vmem:[%s159 + $0x90] sm:$0xff]
      %v193 = vld [vmem:[%s159 + $0x98] sm:$0xff]
      %v194 = vld [vmem:[%s159 + $0xa0] sm:$0xff]
      %v195 = vld [vmem:[%s159 + $0xa8] sm:$0xff]
      %v196 = vld [vmem:[%s159 + $0xb0] sm:$0xff]
      %v197 = vld [vmem:[%s159 + $0xb8] sm:$0xff]
      %v198 = vld [vmem:[%s159 + $0xc0] sm:$0xff]
      %v199 = vld [vmem:[%s159 + $0xc8] sm:$0xff]
      %v200 = vld [vmem:[%s159 + $0xd0] sm:$0xff]
      %v201 = vld [vmem:[%s159 + $0xd8] sm:$0xff]
      %v202 = vld [vmem:[%s159 + $0xe0] sm:$0xff]
      %v203 = vld [vmem:[%s159 + $0xe8] sm:$0xff]
      %v204 = vld [vmem:[%s159 + $0xf0] sm:$0xff]
      %v205 = vld [vmem:[%s159 + $0xf8] sm:$0xff]
      %v206 = vld [vmem:[%s159 + $0x100] sm:$0xff]
      %v207 = vld [vmem:[%s159 + $0x108] sm:$0xff]
      %v208 = vld [vmem:[%s159 + $0x110] sm:$0xff]
      %v209 = vld [vmem:[%s159 + $0x118] sm:$0xff]
      %v210 = vld [vmem:[%s159 + $0x120] sm:$0xff]
      %v211 = vld [vmem:[%s159 + $0x128] sm:$0xff]
      %v212 = vld [vmem:[%s159 + $0x130] sm:$0xff]
      %v213 = vld [vmem:[%s159 + $0x138] sm:$0xff]
      %v214 = vld [vmem:[%s159 + $0x140] sm:$0xff]
      %v215 = vld [vmem:[%s159 + $0x148] sm:$0xff]
      %v216 = vld [vmem:[%s159 + $0x150] sm:$0xff]
      %v217 = vld [vmem:[%s159 + $0x158] sm:$0xff]
      %v218 = vld [vmem:[%s159 + $0x160] sm:$0xff]
      %v219 = vld [vmem:[%s159 + $0x168] sm:$0xff]
      %v220 = vld [vmem:[%s159 + $0x170] sm:$0xff]
      %v221 = vld [vmem:[%s159 + $0x178] sm:$0xff]
      %v222 = vld [vmem:[%s159 + $0x180] sm:$0xff]
      %v223 = vld [vmem:[%s159 + $0x188] sm:$0xff]
      %v224 = vld [vmem:[%s159 + $0x190] sm:$0xff]
      %v225 = vld [vmem:[%s159 + $0x198] sm:$0xff]
      %v226 = vld [vmem:[%s159 + $0x1a0] sm:$0xff]
      %v227 = vld [vmem:[%s159 + $0x1a8] sm:$0xff]
      %v228 = vld [vmem:[%s159 + $0x1b0] sm:$0xff]
      %v229 = vld [vmem:[%s159 + $0x1b8] sm:$0xff]
      %v230 = vld [vmem:[%s159 + $0x1c0] sm:$0xff]
      %v231 = vld [vmem:[%s159 + $0x1c8] sm:$0xff]
      %v232 = vld [vmem:[%s159 + $0x1d0] sm:$0xff]
      %v233 = vld [vmem:[%s159 + $0x1d8] sm:$0xff]
      %v234 = vld [vmem:[%s159 + $0x1e0] sm:$0xff]
      %v235 = vld [vmem:[%s159 + $0x1e8] sm:$0xff]
      %v236 = vld [vmem:[%s159 + $0x1f0] sm:$0xff]
      %v237 = vld [vmem:[%s159 + $0x1f8] sm:$0xff]
      %v238 = vld [vmem:[%s159 + $0x200] sm:$0xff]
      %v239 = vld [vmem:[%s159 + $0x208] sm:$0xff]
      %v240 = vld [vmem:[%s159 + $0x210] sm:$0xff]
      %v241 = vld [vmem:[%s159 + $0x218] sm:$0xff]
      %v242 = vld [vmem:[%s159 + $0x220] sm:$0xff]
      %v243 = vld [vmem:[%s159 + $0x228] sm:$0xff]
      %v244 = vld [vmem:[%s159 + $0x230] sm:$0xff]
      %v245 = vld [vmem:[%s159 + $0x238] sm:$0xff]
      %v246 = vld [vmem:[%s159 + $0x240] sm:$0xff]
      %v247 = vld [vmem:[%s159 + $0x248] sm:$0xff]
      %v248 = vld [vmem:[%s159 + $0x250] sm:$0xff]
      %v249 = vld [vmem:[%s159 + $0x258] sm:$0xff]
      %v250 = vld [vmem:[%s159 + $0x260] sm:$0xff]
      %v251 = vld [vmem:[%s159 + $0x268] sm:$0xff]
      %v252 = vld [vmem:[%s159 + $0x270] sm:$0xff]
      %v253 = vld [vmem:[%s159 + $0x278] sm:$0xff]
      %v254 = vld [vmem:[%s159 + $0x280] sm:$0xff]
      %v255 = vld [vmem:[%s159 + $0x288] sm:$0xff]
      %v256 = vld [vmem:[%s159 + $0x290] sm:$0xff]
      %v257 = vld [vmem:[%s159 + $0x298] sm:$0xff]
      %v258 = vld [vmem:[%s159 + $0x2a0] sm:$0xff]
      %v259 = vld [vmem:[%s159 + $0x2a8] sm:$0xff]
      %v260 = vld [vmem:[%s159 + $0x2b0] sm:$0xff]
      %v261 = vld [vmem:[%s159 + $0x2b8] sm:$0xff]
      %v262 = vld [vmem:[%s159 + $0x2c0] sm:$0xff]
      %v263 = vld [vmem:[%s159 + $0x2c8] sm:$0xff]
      %v264 = vld [vmem:[%s159 + $0x2d0] sm:$0xff]
      %v265 = vld [vmem:[%s159 + $0x2d8] sm:$0xff]
      %v266 = vld [vmem:[%s159 + $0x2e0] sm:$0xff]
      %v267 = vld [vmem:[%s159 + $0x2e8] sm:$0xff]
      %v268 = vld [vmem:[%s159 + $0x2f0] sm:$0xff]
      %v269 = vld [vmem:[%s159 + $0x2f8] sm:$0xff]
      %v270 = vld [vmem:[%s159 + $0x300] sm:$0xff]
      %v271 = vld [vmem:[%s159 + $0x308] sm:$0xff]
      %v272 = vld [vmem:[%s159 + $0x310] sm:$0xff]
      %v273 = vld [vmem:[%s159 + $0x318] sm:$0xff]
      %v274 = vld [vmem:[%s159 + $0x320] sm:$0xff]
      %v275 = vld [vmem:[%s159 + $0x328] sm:$0xff]
      %v276 = vld [vmem:[%s159 + $0x330] sm:$0xff]
      %v277 = vld [vmem:[%s159 + $0x338] sm:$0xff]
      %v278 = vld [vmem:[%s159 + $0x340] sm:$0xff]
      %v279 = vld [vmem:[%s159 + $0x348] sm:$0xff]
      %v280 = vld [vmem:[%s159 + $0x350] sm:$0xff]
      %v281 = vld [vmem:[%s159 + $0x358] sm:$0xff]
      %v282 = vld [vmem:[%s159 + $0x360] sm:$0xff]
      %v283 = vld [vmem:[%s159 + $0x368] sm:$0xff]
      %v284 = vld [vmem:[%s159 + $0x370] sm:$0xff]
      %v285 = vld [vmem:[%s159 + $0x378] sm:$0xff]
      %v286 = vld [vmem:[%s159 + $0x380] sm:$0xff]
      %v287 = vld [vmem:[%s159 + $0x388] sm:$0xff]
      %v288 = vld [vmem:[%s159 + $0x390] sm:$0xff]
      %v289 = vld [vmem:[%s159 + $0x398] sm:$0xff]
      %v290 = vld [vmem:[%s159 + $0x3a0] sm:$0xff]
      %v291 = vld [vmem:[%s159 + $0x3a8] sm:$0xff]
      %v292 = vld [vmem:[%s159 + $0x3b0] sm:$0xff]
      %v293 = vld [vmem:[%s159 + $0x3b8] sm:$0xff]
      %v294 = vld [vmem:[%s159 + $0x3c0] sm:$0xff]
      %v295 = vld [vmem:[%s159 + $0x3c8] sm:$0xff]
      %v296 = vld [vmem:[%s159 + $0x3d0] sm:$0xff]
      %v297 = vld [vmem:[%s159 + $0x3d8] sm:$0xff]
      %v298 = vld [vmem:[%s159 + $0x3e0] sm:$0xff]
      %v299 = vld [vmem:[%s159 + $0x3e8] sm:$0xff]
      %v300 = vld [vmem:[%s159 + $0x3f0] sm:$0xff]
      %v301 = vld [vmem:[%s159 + $0x3f8] sm:$0xff]
      %v302 = vld [vmem:[%s159 + $0x400] sm:$0xff]
      %v303 = vld [vmem:[%s159 + $0x408] sm:$0xff]
      %v304 = vld [vmem:[%s159 + $0x410] sm:$0xff]
      %v305 = vld [vmem:[%s159 + $0x418] sm:$0xff]
      %v306 = vld [vmem:[%s165] sm:$0xff]
      %v307 = vld [vmem:[%s165 + $0x8] sm:$0xff]
      %v308 = vld [vmem:[%s165 + $0x10] sm:$0xff]
      %v309 = vld [vmem:[%s165 + $0x18] sm:$0xff]
      %v310 = vld [vmem:[%s165 + $0x20] sm:$0xff]
      %v311 = vld [vmem:[%s165 + $0x28] sm:$0xff]
      %v312 = vld [vmem:[%s165 + $0x30] sm:$0xff]
      %v313 = vld [vmem:[%s165 + $0x38] sm:$0xff]
      %v314 = vld [vmem:[%s165 + $0x40] sm:$0xff]
      %v315 = vld [vmem:[%s165 + $0x48] sm:$0xff]
      %v316 = vld [vmem:[%s165 + $0x50] sm:$0xff]
      %v317 = vld [vmem:[%s165 + $0x58] sm:$0xff]
      %v318 = vld [vmem:[%s165 + $0x60] sm:$0xff]
      %v319 = vld [vmem:[%s165 + $0x68] sm:$0xff]
      %v320 = vld [vmem:[%s165 + $0x70] sm:$0xff]
      %v321 = vld [vmem:[%s165 + $0x78] sm:$0xff]
      %v322 = vld [vmem:[%s165 + $0x80] sm:$0xff]
      %v323 = vld [vmem:[%s165 + $0x88] sm:$0xff]
      %v324 = vld [vmem:[%s165 + $0x90] sm:$0xff]
      %v325 = vld [vmem:[%s165 + $0x98] sm:$0xff]
      %v326 = vld [vmem:[%s165 + $0xa0] sm:$0xff]
      %v327 = vld [vmem:[%s165 + $0xa8] sm:$0xff]
      %v328 = vld [vmem:[%s165 + $0xb0] sm:$0xff]
      %v329 = vld [vmem:[%s165 + $0xb8] sm:$0xff]
      %v330 = vld [vmem:[%s165 + $0xc0] sm:$0xff]
      %v331 = vld [vmem:[%s165 + $0xc8] sm:$0xff]
      %v332 = vld [vmem:[%s165 + $0xd0] sm:$0xff]
      %v333 = vld [vmem:[%s165 + $0xd8] sm:$0xff]
      %v334 = vld [vmem:[%s165 + $0xe0] sm:$0xff]
      %v335 = vld [vmem:[%s165 + $0xe8] sm:$0xff]
      %v336 = vld [vmem:[%s165 + $0xf0] sm:$0xff]
      %v337 = vld [vmem:[%s165 + $0xf8] sm:$0xff]
      %v338 = vld [vmem:[%s165 + $0x100] sm:$0xff]
      %v339 = vld [vmem:[%s165 + $0x108] sm:$0xff]
      %v340 = vld [vmem:[%s165 + $0x110] sm:$0xff]
      %v341 = vld [vmem:[%s165 + $0x118] sm:$0xff]
      %v342 = vld [vmem:[%s165 + $0x120] sm:$0xff]
      %v343 = vld [vmem:[%s165 + $0x128] sm:$0xff]
      %v344 = vld [vmem:[%s165 + $0x130] sm:$0xff]
      %v345 = vld [vmem:[%s165 + $0x138] sm:$0xff]
      %v346 = vld [vmem:[%s165 + $0x140] sm:$0xff]
      %v347 = vld [vmem:[%s165 + $0x148] sm:$0xff]
      %v348 = vld [vmem:[%s165 + $0x150] sm:$0xff]
      %v349 = vld [vmem:[%s165 + $0x158] sm:$0xff]
      %v350 = vld [vmem:[%s165 + $0x160] sm:$0xff]
      %v351 = vld [vmem:[%s165 + $0x168] sm:$0xff]
      %v352 = vld [vmem:[%s165 + $0x170] sm:$0xff]
      %v353 = vld [vmem:[%s165 + $0x178] sm:$0xff]
      %v354 = vld [vmem:[%s165 + $0x180] sm:$0xff]
      %v355 = vld [vmem:[%s165 + $0x188] sm:$0xff]
      %v356 = vld [vmem:[%s165 + $0x190] sm:$0xff]
      %v357 = vld [vmem:[%s165 + $0x198] sm:$0xff]
      %v358 = vld [vmem:[%s165 + $0x1a0] sm:$0xff]
      %v359 = vld [vmem:[%s165 + $0x1a8] sm:$0xff]
      %v360 = vld [vmem:[%s165 + $0x1b0] sm:$0xff]
      %v361 = vld [vmem:[%s165 + $0x1b8] sm:$0xff]
      %v362 = vld [vmem:[%s165 + $0x1c0] sm:$0xff]
      %v363 = vld [vmem:[%s165 + $0x1c8] sm:$0xff]
      %v364 = vld [vmem:[%s165 + $0x1d0] sm:$0xff]
      %v365 = vld [vmem:[%s165 + $0x1d8] sm:$0xff]
      %v366 = vld [vmem:[%s165 + $0x1e0] sm:$0xff]
      %v367 = vld [vmem:[%s165 + $0x1e8] sm:$0xff]
      %v368 = vld [vmem:[%s165 + $0x1f0] sm:$0xff]
      %v369 = vld [vmem:[%s165 + $0x1f8] sm:$0xff]
      %v370 = vld [vmem:[%s165 + $0x200] sm:$0xff]
      %v371 = vld [vmem:[%s165 + $0x208] sm:$0xff]
      %373 = vset.pattern.permute.xlu0 0
      %374 = vperm.xlu0 %373, %v306
      %v375 = vpop.permute.xlu0 %374
      %378 = vset.pattern.permute.xlu0 0
      %379 = vperm.xlu0 %378, %v307
      %v380 = vpop.permute.xlu0 %379
      %383 = vset.pattern.permute.xlu0 0
      %384 = vperm.xlu0 %383, %v308
      %v385 = vpop.permute.xlu0 %384
      %388 = vset.pattern.permute.xlu0 0
      %389 = vperm.xlu0 %388, %v309
      %v390 = vpop.permute.xlu0 %389
      %393 = vset.pattern.permute.xlu0 0
      %394 = vperm.xlu0 %393, %v310
      %v395 = vpop.permute.xlu0 %394
      %398 = vset.pattern.permute.xlu0 0
      %399 = vperm.xlu0 %398, %v311
      %v400 = vpop.permute.xlu0 %399
      %403 = vset.pattern.permute.xlu0 0
      %404 = vperm.xlu0 %403, %v312
      %v405 = vpop.permute.xlu0 %404
      %408 = vset.pattern.permute.xlu0 0
      %409 = vperm.xlu0 %408, %v313
      %v410 = vpop.permute.xlu0 %409
      %413 = vset.pattern.permute.xlu0 0
      %414 = vperm.xlu0 %413, %v314
      %v415 = vpop.permute.xlu0 %414
      %418 = vset.pattern.permute.xlu0 0
      %419 = vperm.xlu0 %418, %v315
      %v420 = vpop.permute.xlu0 %419
      %423 = vset.pattern.permute.xlu0 0
      %424 = vperm.xlu0 %423, %v316
      %v425 = vpop.permute.xlu0 %424
      %428 = vset.pattern.permute.xlu0 0
      %429 = vperm.xlu0 %428, %v317
      %v430 = vpop.permute.xlu0 %429
      %433 = vset.pattern.permute.xlu0 0
      %434 = vperm.xlu0 %433, %v318
      %v435 = vpop.permute.xlu0 %434
      %438 = vset.pattern.permute.xlu0 0
      %439 = vperm.xlu0 %438, %v319
      %v440 = vpop.permute.xlu0 %439
      %443 = vset.pattern.permute.xlu0 0
      %444 = vperm.xlu0 %443, %v320
      %v445 = vpop.permute.xlu0 %444
      %448 = vset.pattern.permute.xlu0 0
      %449 = vperm.xlu0 %448, %v321
      %v450 = vpop.permute.xlu0 %449
      %453 = vset.pattern.permute.xlu0 0
      %454 = vperm.xlu0 %453, %v322
      %v455 = vpop.permute.xlu0 %454
      %458 = vset.pattern.permute.xlu0 0
      %459 = vperm.xlu0 %458, %v323
      %v460 = vpop.permute.xlu0 %459
      %463 = vset.pattern.permute.xlu0 0
      %464 = vperm.xlu0 %463, %v324
      %v465 = vpop.permute.xlu0 %464
      %468 = vset.pattern.permute.xlu0 0
      %469 = vperm.xlu0 %468, %v325
      %v470 = vpop.permute.xlu0 %469
      %473 = vset.pattern.permute.xlu0 0
      %474 = vperm.xlu0 %473, %v326
      %v475 = vpop.permute.xlu0 %474
      %478 = vset.pattern.permute.xlu0 0
      %479 = vperm.xlu0 %478, %v327
      %v480 = vpop.permute.xlu0 %479
      %483 = vset.pattern.permute.xlu0 0
      %484 = vperm.xlu0 %483, %v328
      %v485 = vpop.permute.xlu0 %484
      %488 = vset.pattern.permute.xlu0 0
      %489 = vperm.xlu0 %488, %v329
      %v490 = vpop.permute.xlu0 %489
      %493 = vset.pattern.permute.xlu0 0
      %494 = vperm.xlu0 %493, %v330
      %v495 = vpop.permute.xlu0 %494
      %498 = vset.pattern.permute.xlu0 0
      %499 = vperm.xlu0 %498, %v331
      %v500 = vpop.permute.xlu0 %499
      %503 = vset.pattern.permute.xlu0 0
      %504 = vperm.xlu0 %503, %v332
      %v505 = vpop.permute.xlu0 %504
      %508 = vset.pattern.permute.xlu0 0
      %509 = vperm.xlu0 %508, %v333
      %v510 = vpop.permute.xlu0 %509
      %513 = vset.pattern.permute.xlu0 0
      %514 = vperm.xlu0 %513, %v334
      %v515 = vpop.permute.xlu0 %514
      %518 = vset.pattern.permute.xlu0 0
      %519 = vperm.xlu0 %518, %v335
      %v520 = vpop.permute.xlu0 %519
      %523 = vset.pattern.permute.xlu0 0
      %524 = vperm.xlu0 %523, %v336
      %v525 = vpop.permute.xlu0 %524
      %528 = vset.pattern.permute.xlu0 0
      %529 = vperm.xlu0 %528, %v337
      %v530 = vpop.permute.xlu0 %529
      %533 = vset.pattern.permute.xlu0 0
      %534 = vperm.xlu0 %533, %v338
      %v535 = vpop.permute.xlu0 %534
      %538 = vset.pattern.permute.xlu0 0
      %539 = vperm.xlu0 %538, %v339
      %v540 = vpop.permute.xlu0 %539
      %543 = vset.pattern.permute.xlu0 0
      %544 = vperm.xlu0 %543, %v340
      %v545 = vpop.permute.xlu0 %544
      %548 = vset.pattern.permute.xlu0 0
      %549 = vperm.xlu0 %548, %v341
      %v550 = vpop.permute.xlu0 %549
      %553 = vset.pattern.permute.xlu0 0
      %554 = vperm.xlu0 %553, %v342
      %v555 = vpop.permute.xlu0 %554
      %558 = vset.pattern.permute.xlu0 0
      %559 = vperm.xlu0 %558, %v343
      %v560 = vpop.permute.xlu0 %559
      %563 = vset.pattern.permute.xlu0 0
      %564 = vperm.xlu0 %563, %v344
      %v565 = vpop.permute.xlu0 %564
      %568 = vset.pattern.permute.xlu0 0
      %569 = vperm.xlu0 %568, %v345
      %v570 = vpop.permute.xlu0 %569
      %573 = vset.pattern.permute.xlu0 0
      %574 = vperm.xlu0 %573, %v346
      %v575 = vpop.permute.xlu0 %574
      %578 = vset.pattern.permute.xlu0 0
      %579 = vperm.xlu0 %578, %v347
      %v580 = vpop.permute.xlu0 %579
      %583 = vset.pattern.permute.xlu0 0
      %584 = vperm.xlu0 %583, %v348
      %v585 = vpop.permute.xlu0 %584
      %588 = vset.pattern.permute.xlu0 0
      %589 = vperm.xlu0 %588, %v349
      %v590 = vpop.permute.xlu0 %589
      %593 = vset.pattern.permute.xlu0 0
      %594 = vperm.xlu0 %593, %v350
      %v595 = vpop.permute.xlu0 %594
      %598 = vset.pattern.permute.xlu0 0
      %599 = vperm.xlu0 %598, %v351
      %v600 = vpop.permute.xlu0 %599
      %603 = vset.pattern.permute.xlu0 0
      %604 = vperm.xlu0 %603, %v352
      %v605 = vpop.permute.xlu0 %604
      %608 = vset.pattern.permute.xlu0 0
      %609 = vperm.xlu0 %608, %v353
      %v610 = vpop.permute.xlu0 %609
      %613 = vset.pattern.permute.xlu0 0
      %614 = vperm.xlu0 %613, %v354
      %v615 = vpop.permute.xlu0 %614
      %618 = vset.pattern.permute.xlu0 0
      %619 = vperm.xlu0 %618, %v355
      %v620 = vpop.permute.xlu0 %619
      %623 = vset.pattern.permute.xlu0 0
      %624 = vperm.xlu0 %623, %v356
      %v625 = vpop.permute.xlu0 %624
      %628 = vset.pattern.permute.xlu0 0
      %629 = vperm.xlu0 %628, %v357
      %v630 = vpop.permute.xlu0 %629
      %633 = vset.pattern.permute.xlu0 0
      %634 = vperm.xlu0 %633, %v358
      %v635 = vpop.permute.xlu0 %634
      %638 = vset.pattern.permute.xlu0 0
      %639 = vperm.xlu0 %638, %v359
      %v640 = vpop.permute.xlu0 %639
      %643 = vset.pattern.permute.xlu0 0
      %644 = vperm.xlu0 %643, %v360
      %v645 = vpop.permute.xlu0 %644
      %648 = vset.pattern.permute.xlu0 0
      %649 = vperm.xlu0 %648, %v361
      %v650 = vpop.permute.xlu0 %649
      %653 = vset.pattern.permute.xlu0 0
      %654 = vperm.xlu0 %653, %v362
      %v655 = vpop.permute.xlu0 %654
      %658 = vset.pattern.permute.xlu0 0
      %659 = vperm.xlu0 %658, %v363
      %v660 = vpop.permute.xlu0 %659
      %663 = vset.pattern.permute.xlu0 0
      %664 = vperm.xlu0 %663, %v364
      %v665 = vpop.permute.xlu0 %664
      %668 = vset.pattern.permute.xlu0 0
      %669 = vperm.xlu0 %668, %v365
      %v670 = vpop.permute.xlu0 %669
      %673 = vset.pattern.permute.xlu0 0
      %674 = vperm.xlu0 %673, %v366
      %v675 = vpop.permute.xlu0 %674
      %678 = vset.pattern.permute.xlu0 0
      %679 = vperm.xlu0 %678, %v367
      %v680 = vpop.permute.xlu0 %679
      %683 = vset.pattern.permute.xlu0 0
      %684 = vperm.xlu0 %683, %v368
      %v685 = vpop.permute.xlu0 %684
      %688 = vset.pattern.permute.xlu0 0
      %689 = vperm.xlu0 %688, %v369
      %v690 = vpop.permute.xlu0 %689
      %693 = vset.pattern.permute.xlu0 0
      %694 = vperm.xlu0 %693, %v370
      %v695 = vpop.permute.xlu0 %694
      %698 = vset.pattern.permute.xlu0 0
      %699 = vperm.xlu0 %698, %v371
      %v700 = vpop.permute.xlu0 %699
      %v702 = vmul.f32 %v174, %v375
      %v703 = vmul.f32 %v175, %v375
      %v704 = vmul.f32 %v176, %v380
      %v705 = vmul.f32 %v177, %v380
      %v706 = vmul.f32 %v178, %v385
      %v707 = vmul.f32 %v179, %v385
      %v708 = vmul.f32 %v180, %v390
      %v709 = vmul.f32 %v181, %v390
      %v710 = vmul.f32 %v182, %v395
      %v711 = vmul.f32 %v183, %v395
      %v712 = vmul.f32 %v184, %v400
      %v713 = vmul.f32 %v185, %v400
      %v714 = vmul.f32 %v186, %v405
      %v715 = vmul.f32 %v187, %v405
      %v716 = vmul.f32 %v188, %v410
      %v717 = vmul.f32 %v189, %v410
      %v718 = vmul.f32 %v190, %v415
      %v719 = vmul.f32 %v191, %v415
      %v720 = vmul.f32 %v192, %v420
      %v721 = vmul.f32 %v193, %v420
      %v722 = vmul.f32 %v194, %v425
      %v723 = vmul.f32 %v195, %v425
      %v724 = vmul.f32 %v196, %v430
      %v725 = vmul.f32 %v197, %v430
      %v726 = vmul.f32 %v198, %v435
      %v727 = vmul.f32 %v199, %v435
      %v728 = vmul.f32 %v200, %v440
      %v729 = vmul.f32 %v201, %v440
      %v730 = vmul.f32 %v202, %v445
      %v731 = vmul.f32 %v203, %v445
      %v732 = vmul.f32 %v204, %v450
      %v733 = vmul.f32 %v205, %v450
      %v734 = vmul.f32 %v206, %v455
      %v735 = vmul.f32 %v207, %v455
      %v736 = vmul.f32 %v208, %v460
      %v737 = vmul.f32 %v209, %v460
      %v738 = vmul.f32 %v210, %v465
      %v739 = vmul.f32 %v211, %v465
      %v740 = vmul.f32 %v212, %v470
      %v741 = vmul.f32 %v213, %v470
      %v742 = vmul.f32 %v214, %v475
      %v743 = vmul.f32 %v215, %v475
      %v744 = vmul.f32 %v216, %v480
      %v745 = vmul.f32 %v217, %v480
      %v746 = vmul.f32 %v218, %v485
      %v747 = vmul.f32 %v219, %v485
      %v748 = vmul.f32 %v220, %v490
      %v749 = vmul.f32 %v221, %v490
      %v750 = vmul.f32 %v222, %v495
      %v751 = vmul.f32 %v223, %v495
      %v752 = vmul.f32 %v224, %v500
      %v753 = vmul.f32 %v225, %v500
      %v754 = vmul.f32 %v226, %v505
      %v755 = vmul.f32 %v227, %v505
      %v756 = vmul.f32 %v228, %v510
      %v757 = vmul.f32 %v229, %v510
      %v758 = vmul.f32 %v230, %v515
      %v759 = vmul.f32 %v231, %v515
      %v760 = vmul.f32 %v232, %v520
      %v761 = vmul.f32 %v233, %v520
      %v762 = vmul.f32 %v234, %v525
      %v763 = vmul.f32 %v235, %v525
      %v764 = vmul.f32 %v236, %v530
      %v765 = vmul.f32 %v237, %v530
      %v766 = vmul.f32 %v238, %v535
      %v767 = vmul.f32 %v239, %v535
      %v768 = vmul.f32 %v240, %v540
      %v769 = vmul.f32 %v241, %v540
      %v770 = vmul.f32 %v242, %v545
      %v771 = vmul.f32 %v243, %v545
      %v772 = vmul.f32 %v244, %v550
      %v773 = vmul.f32 %v245, %v550
      %v774 = vmul.f32 %v246, %v555
      %v775 = vmul.f32 %v247, %v555
      %v776 = vmul.f32 %v248, %v560
      %v777 = vmul.f32 %v249, %v560
      %v778 = vmul.f32 %v250, %v565
      %v779 = vmul.f32 %v251, %v565
      %v780 = vmul.f32 %v252, %v570
      %v781 = vmul.f32 %v253, %v570
      %v782 = vmul.f32 %v254, %v575
      %v783 = vmul.f32 %v255, %v575
      %v784 = vmul.f32 %v256, %v580
      %v785 = vmul.f32 %v257, %v580
      %v786 = vmul.f32 %v258, %v585
      %v787 = vmul.f32 %v259, %v585
      %v788 = vmul.f32 %v260, %v590
      %v789 = vmul.f32 %v261, %v590
      %v790 = vmul.f32 %v262, %v595
      %v791 = vmul.f32 %v263, %v595
      %v792 = vmul.f32 %v264, %v600
      %v793 = vmul.f32 %v265, %v600
      %v794 = vmul.f32 %v266, %v605
      %v795 = vmul.f32 %v267, %v605
      %v796 = vmul.f32 %v268, %v610
      %v797 = vmul.f32 %v269, %v610
      %v798 = vmul.f32 %v270, %v615
      %v799 = vmul.f32 %v271, %v615
      %v800 = vmul.f32 %v272, %v620
      %v801 = vmul.f32 %v273, %v620
      %v802 = vmul.f32 %v274, %v625
      %v803 = vmul.f32 %v275, %v625
      %v804 = vmul.f32 %v276, %v630
      %v805 = vmul.f32 %v277, %v630
      %v806 = vmul.f32 %v278, %v635
      %v807 = vmul.f32 %v279, %v635
      %v808 = vmul.f32 %v280, %v640
      %v809 = vmul.f32 %v281, %v640
      %v810 = vmul.f32 %v282, %v645
      %v811 = vmul.f32 %v283, %v645
      %v812 = vmul.f32 %v284, %v650
      %v813 = vmul.f32 %v285, %v650
      %v814 = vmul.f32 %v286, %v655
      %v815 = vmul.f32 %v287, %v655
      %v816 = vmul.f32 %v288, %v660
      %v817 = vmul.f32 %v289, %v660
      %v818 = vmul.f32 %v290, %v665
      %v819 = vmul.f32 %v291, %v665
      %v820 = vmul.f32 %v292, %v670
      %v821 = vmul.f32 %v293, %v670
      %v822 = vmul.f32 %v294, %v675
      %v823 = vmul.f32 %v295, %v675
      %v824 = vmul.f32 %v296, %v680
      %v825 = vmul.f32 %v297, %v680
      %v826 = vmul.f32 %v298, %v685
      %v827 = vmul.f32 %v299, %v685
      %v828 = vmul.f32 %v300, %v690
      %v829 = vmul.f32 %v301, %v690
      %v830 = vmul.f32 %v302, %v695
      %v831 = vmul.f32 %v303, %v695
      %v832 = vmul.f32 %v304, %v700
      %v833 = vmul.f32 %v305, %v700
      %834 = vst [vmem:[%s172] sm:$0xff] %v702
      %vm835 = vcmask 556032
      %836 = vst.msk [vmem:[%s172 + $0x8] sm:$0xff] %vm835, %v703
      %837 = vst [vmem:[%s172 + $0x10] sm:$0xff] %v704
      %838 = vst.msk [vmem:[%s172 + $0x18] sm:$0xff] %vm835, %v705
      %839 = vst [vmem:[%s172 + $0x20] sm:$0xff] %v706
      %840 = vst.msk [vmem:[%s172 + $0x28] sm:$0xff] %vm835, %v707
      %841 = vst [vmem:[%s172 + $0x30] sm:$0xff] %v708
      %842 = vst.msk [vmem:[%s172 + $0x38] sm:$0xff] %vm835, %v709
      %843 = vst [vmem:[%s172 + $0x40] sm:$0xff] %v710
      %844 = vst.msk [vmem:[%s172 + $0x48] sm:$0xff] %vm835, %v711
      %845 = vst [vmem:[%s172 + $0x50] sm:$0xff] %v712
      %846 = vst.msk [vmem:[%s172 + $0x58] sm:$0xff] %vm835, %v713
      %847 = vst [vmem:[%s172 + $0x60] sm:$0xff] %v714
      %848 = vst.msk [vmem:[%s172 + $0x68] sm:$0xff] %vm835, %v715
      %849 = vst [vmem:[%s172 + $0x70] sm:$0xff] %v716
      %850 = vst.msk [vmem:[%s172 + $0x78] sm:$0xff] %vm835, %v717
      %851 = vst [vmem:[%s172 + $0x80] sm:$0xff] %v718
      %852 = vst.msk [vmem:[%s172 + $0x88] sm:$0xff] %vm835, %v719
      %853 = vst [vmem:[%s172 + $0x90] sm:$0xff] %v720
      %854 = vst.msk [vmem:[%s172 + $0x98] sm:$0xff] %vm835, %v721
      %855 = vst [vmem:[%s172 + $0xa0] sm:$0xff] %v722
      %856 = vst.msk [vmem:[%s172 + $0xa8] sm:$0xff] %vm835, %v723
      %857 = vst [vmem:[%s172 + $0xb0] sm:$0xff] %v724
      %858 = vst.msk [vmem:[%s172 + $0xb8] sm:$0xff] %vm835, %v725
      %859 = vst [vmem:[%s172 + $0xc0] sm:$0xff] %v726
      %860 = vst.msk [vmem:[%s172 + $0xc8] sm:$0xff] %vm835, %v727
      %861 = vst [vmem:[%s172 + $0xd0] sm:$0xff] %v728
      %862 = vst.msk [vmem:[%s172 + $0xd8] sm:$0xff] %vm835, %v729
      %863 = vst [vmem:[%s172 + $0xe0] sm:$0xff] %v730
      %864 = vst.msk [vmem:[%s172 + $0xe8] sm:$0xff] %vm835, %v731
      %865 = vst [vmem:[%s172 + $0xf0] sm:$0xff] %v732
      %866 = vst.msk [vmem:[%s172 + $0xf8] sm:$0xff] %vm835, %v733
      %867 = vst [vmem:[%s172 + $0x100] sm:$0xff] %v734
      %868 = vst.msk [vmem:[%s172 + $0x108] sm:$0xff] %vm835, %v735
      %869 = vst [vmem:[%s172 + $0x110] sm:$0xff] %v736
      %870 = vst.msk [vmem:[%s172 + $0x118] sm:$0xff] %vm835, %v737
      %871 = vst [vmem:[%s172 + $0x120] sm:$0xff] %v738
      %872 = vst.msk [vmem:[%s172 + $0x128] sm:$0xff] %vm835, %v739
      %873 = vst [vmem:[%s172 + $0x130] sm:$0xff] %v740
      %874 = vst.msk [vmem:[%s172 + $0x138] sm:$0xff] %vm835, %v741
      %875 = vst [vmem:[%s172 + $0x140] sm:$0xff] %v742
      %876 = vst.msk [vmem:[%s172 + $0x148] sm:$0xff] %vm835, %v743
      %877 = vst [vmem:[%s172 + $0x150] sm:$0xff] %v744
      %878 = vst.msk [vmem:[%s172 + $0x158] sm:$0xff] %vm835, %v745
      %879 = vst [vmem:[%s172 + $0x160] sm:$0xff] %v746
      %880 = vst.msk [vmem:[%s172 + $0x168] sm:$0xff] %vm835, %v747
      %881 = vst [vmem:[%s172 + $0x170] sm:$0xff] %v748
      %882 = vst.msk [vmem:[%s172 + $0x178] sm:$0xff] %vm835, %v749
      %883 = vst [vmem:[%s172 + $0x180] sm:$0xff] %v750
      %884 = vst.msk [vmem:[%s172 + $0x188] sm:$0xff] %vm835, %v751
      %885 = vst [vmem:[%s172 + $0x190] sm:$0xff] %v752
      %886 = vst.msk [vmem:[%s172 + $0x198] sm:$0xff] %vm835, %v753
      %887 = vst [vmem:[%s172 + $0x1a0] sm:$0xff] %v754
      %888 = vst.msk [vmem:[%s172 + $0x1a8] sm:$0xff] %vm835, %v755
      %889 = vst [vmem:[%s172 + $0x1b0] sm:$0xff] %v756
      %890 = vst.msk [vmem:[%s172 + $0x1b8] sm:$0xff] %vm835, %v757
      %891 = vst [vmem:[%s172 + $0x1c0] sm:$0xff] %v758
      %892 = vst.msk [vmem:[%s172 + $0x1c8] sm:$0xff] %vm835, %v759
      %893 = vst [vmem:[%s172 + $0x1d0] sm:$0xff] %v760
      %894 = vst.msk [vmem:[%s172 + $0x1d8] sm:$0xff] %vm835, %v761
      %895 = vst [vmem:[%s172 + $0x1e0] sm:$0xff] %v762
      %896 = vst.msk [vmem:[%s172 + $0x1e8] sm:$0xff] %vm835, %v763
      %897 = vst [vmem:[%s172 + $0x1f0] sm:$0xff] %v764
      %898 = vst.msk [vmem:[%s172 + $0x1f8] sm:$0xff] %vm835, %v765
      %899 = vst [vmem:[%s172 + $0x200] sm:$0xff] %v766
      %900 = vst.msk [vmem:[%s172 + $0x208] sm:$0xff] %vm835, %v767
      %901 = vst [vmem:[%s172 + $0x210] sm:$0xff] %v768
      %902 = vst.msk [vmem:[%s172 + $0x218] sm:$0xff] %vm835, %v769
      %903 = vst [vmem:[%s172 + $0x220] sm:$0xff] %v770
      %904 = vst.msk [vmem:[%s172 + $0x228] sm:$0xff] %vm835, %v771
      %905 = vst [vmem:[%s172 + $0x230] sm:$0xff] %v772
      %906 = vst.msk [vmem:[%s172 + $0x238] sm:$0xff] %vm835, %v773
      %907 = vst [vmem:[%s172 + $0x240] sm:$0xff] %v774
      %908 = vst.msk [vmem:[%s172 + $0x248] sm:$0xff] %vm835, %v775
      %909 = vst [vmem:[%s172 + $0x250] sm:$0xff] %v776
      %910 = vst.msk [vmem:[%s172 + $0x258] sm:$0xff] %vm835, %v777
      %911 = vst [vmem:[%s172 + $0x260] sm:$0xff] %v778
      %912 = vst.msk [vmem:[%s172 + $0x268] sm:$0xff] %vm835, %v779
      %913 = vst [vmem:[%s172 + $0x270] sm:$0xff] %v780
      %914 = vst.msk [vmem:[%s172 + $0x278] sm:$0xff] %vm835, %v781
      %915 = vst [vmem:[%s172 + $0x280] sm:$0xff] %v782
      %916 = vst.msk [vmem:[%s172 + $0x288] sm:$0xff] %vm835, %v783
      %917 = vst [vmem:[%s172 + $0x290] sm:$0xff] %v784
      %918 = vst.msk [vmem:[%s172 + $0x298] sm:$0xff] %vm835, %v785
      %919 = vst [vmem:[%s172 + $0x2a0] sm:$0xff] %v786
      %920 = vst.msk [vmem:[%s172 + $0x2a8] sm:$0xff] %vm835, %v787
      %921 = vst [vmem:[%s172 + $0x2b0] sm:$0xff] %v788
      %922 = vst.msk [vmem:[%s172 + $0x2b8] sm:$0xff] %vm835, %v789
      %923 = vst [vmem:[%s172 + $0x2c0] sm:$0xff] %v790
      %924 = vst.msk [vmem:[%s172 + $0x2c8] sm:$0xff] %vm835, %v791
      %925 = vst [vmem:[%s172 + $0x2d0] sm:$0xff] %v792
      %926 = vst.msk [vmem:[%s172 + $0x2d8] sm:$0xff] %vm835, %v793
      %927 = vst [vmem:[%s172 + $0x2e0] sm:$0xff] %v794
      %928 = vst.msk [vmem:[%s172 + $0x2e8] sm:$0xff] %vm835, %v795
      %929 = vst [vmem:[%s172 + $0x2f0] sm:$0xff] %v796
      %930 = vst.msk [vmem:[%s172 + $0x2f8] sm:$0xff] %vm835, %v797
      %931 = vst [vmem:[%s172 + $0x300] sm:$0xff] %v798
      %932 = vst.msk [vmem:[%s172 + $0x308] sm:$0xff] %vm835, %v799
      %933 = vst [vmem:[%s172 + $0x310] sm:$0xff] %v800
      %934 = vst.msk [vmem:[%s172 + $0x318] sm:$0xff] %vm835, %v801
      %935 = vst [vmem:[%s172 + $0x320] sm:$0xff] %v802
      %936 = vst.msk [vmem:[%s172 + $0x328] sm:$0xff] %vm835, %v803
      %937 = vst [vmem:[%s172 + $0x330] sm:$0xff] %v804
      %938 = vst.msk [vmem:[%s172 + $0x338] sm:$0xff] %vm835, %v805
      %939 = vst [vmem:[%s172 + $0x340] sm:$0xff] %v806
      %940 = vst.msk [vmem:[%s172 + $0x348] sm:$0xff] %vm835, %v807
      %941 = vst [vmem:[%s172 + $0x350] sm:$0xff] %v808
      %942 = vst.msk [vmem:[%s172 + $0x358] sm:$0xff] %vm835, %v809
      %943 = vst [vmem:[%s172 + $0x360] sm:$0xff] %v810
      %944 = vst.msk [vmem:[%s172 + $0x368] sm:$0xff] %vm835, %v811
      %945 = vst [vmem:[%s172 + $0x370] sm:$0xff] %v812
      %946 = vst.msk [vmem:[%s172 + $0x378] sm:$0xff] %vm835, %v813
      %947 = vst [vmem:[%s172 + $0x380] sm:$0xff] %v814
      %948 = vst.msk [vmem:[%s172 + $0x388] sm:$0xff] %vm835, %v815
      %949 = vst [vmem:[%s172 + $0x390] sm:$0xff] %v816
      %950 = vst.msk [vmem:[%s172 + $0x398] sm:$0xff] %vm835, %v817
      %951 = vst [vmem:[%s172 + $0x3a0] sm:$0xff] %v818
      %952 = vst.msk [vmem:[%s172 + $0x3a8] sm:$0xff] %vm835, %v819
      %953 = vst [vmem:[%s172 + $0x3b0] sm:$0xff] %v820
      %954 = vst.msk [vmem:[%s172 + $0x3b8] sm:$0xff] %vm835, %v821
      %955 = vst [vmem:[%s172 + $0x3c0] sm:$0xff] %v822
      %956 = vst.msk [vmem:[%s172 + $0x3c8] sm:$0xff] %vm835, %v823
      %957 = vst [vmem:[%s172 + $0x3d0] sm:$0xff] %v824
      %958 = vst.msk [vmem:[%s172 + $0x3d8] sm:$0xff] %vm835, %v825
      %959 = vst [vmem:[%s172 + $0x3e0] sm:$0xff] %v826
      %960 = vst.msk [vmem:[%s172 + $0x3e8] sm:$0xff] %vm835, %v827
      %961 = vst [vmem:[%s172 + $0x3f0] sm:$0xff] %v828
      %962 = vst.msk [vmem:[%s172 + $0x3f8] sm:$0xff] %vm835, %v829
      %963 = vst [vmem:[%s172 + $0x400] sm:$0xff] %v830
      %964 = vst.msk [vmem:[%s172 + $0x408] sm:$0xff] %vm835, %v831
      %965 = vst [vmem:[%s172 + $0x410] sm:$0xff] %v832
      %966 = vst.msk [vmem:[%s172 + $0x418] sm:$0xff] %vm835, %v833
      %s967 = smul.u32 66, %s13
      %p968 = scmp.lt.s32.totalorder %s967, 131
      %s969 = scalar_select %p968, %s967, 131
      %s970 = smul.addr %s969, 2
      %s971 = smul.addr %s970, 8
      %s972 = scalar_lea.vmem %s2, %s971
      // Predicated region
      $region29: #{tpu_custom_call.1} parent=27 // pred_check
        %p973 = pneg %p83
      $region30: #{tpu_custom_call.1} parent=27 // pred_check_branch
        %975 = sbr.rel (%p973) target = $region32
      $region31: #{tpu_custom_call.1} parent=27 // pred_region
        %s976 = smul.u32 66, %s13
      $region32: #{tpu_custom_call.1} parent=27 // pred_fallthru
        _
    $region28: #{tpu_custom_call.1} parent=5 // pred_fallthru
      _
    %p977 = scmp.le.s32.totalorder 2, %s8
    // Predicated region
    $region33: #{tpu_custom_call.1} parent=5 // pred_check
      %p978 = pneg %p977
    $region34: #{tpu_custom_call.1} parent=5 // pred_check_branch
      %980 = sbr.rel (%p978) target = $region36
    $region35: #{tpu_custom_call.1} parent=5 // pred_region
      %s981 = ssub.s32 %s8, 2
      // Predicated region
      $region37: #{tpu_custom_call.1} parent=35 // pred_check
        %p982 = pneg %p89
      $region38: #{tpu_custom_call.1} parent=35 // pred_check_branch
        %984 = sbr.rel (%p982) target = $region40
      $region39: #{tpu_custom_call.1} parent=35 // pred_region
        %s985 = smul.u32 66, %s14
        %p986 = scmp.lt.s32.totalorder %s985, 131
        %s987 = scalar_select %p986, %s985, 131
        %s988 = smul.addr %s987, 2
        %s989 = smul.addr %s988, 8
        %s990 = scalar_lea.vmem %s2, %s989
      $region40: #{tpu_custom_call.1} parent=35 // pred_fallthru
        _
    $region36: #{tpu_custom_call.1} parent=5 // pred_fallthru
      _
  $region6: #{tpu_custom_call.1} parent=0 // loop_footer
    %s12 = sadd.s32 1, %s8
  $region7: #{tpu_custom_call.1} parent=0 // loop_footer_branch
    %7 = sbr.rel target = $region3
  $region8: #{tpu_custom_call.1} parent=0 // loop_exit
    _

</llo_original>
